<compile_context>
chip_gen: v5e
topology: v5e:2x2
jax: 0.10.0
libtpu: 0.0.40
codegen_flags: <defaults>
</compile_context>

<pallas_src>
import functools
from typing import NamedTuple, Optional, Any

import jax
import jax.numpy as jnp
from jax.experimental import pallas as pl
from jax.experimental.pallas import tpu as pltpu


# ------------------------------ kernel ---------------------------------------

def _pca_kernel(x_ref, mean_ref, compt_ref, o_ref, *, precision):
    """o = (X_tile - mean) @ components^T  (exact PyTorch semantics).

    The (tm, d) VPU subtract is hidden under the MXU matmul / X DMA stream
    (VALU slots have large slack in this mem-bound kernel), so it is free and
    avoids folding the mean into an output offset (which can cancel badly).
    """
    centered = x_ref[...].astype(jnp.float32) - mean_ref[...].astype(jnp.float32)
    proj = jnp.dot(
        centered.astype(compt_ref.dtype),
        compt_ref[...],
        preferred_element_type=jnp.float32,
        precision=precision,
    )                                                   # (tm, width), f32
    o_ref[...] = proj.astype(o_ref.dtype)


# ------------------------------ helpers --------------------------------------

def _round_up(x, m):
    return ((x + m - 1) // m) * m


def _vmem_budgets():
    """Generation-aware (scoped-VMEM request, tile budget) in bytes.

    v5e / v6e have 128 MiB physical VMEM -> raise the scoped limit so large d
    keeps the big row tile.  v7x has 64 MiB per TensorCore -> stay at 32 MiB.
    """
    cap = None
    get_info = getattr(pltpu, "get_tpu_info", None)
    if get_info is not None:
        try:
            cap = int(get_info().vmem_capacity_bytes)
        except Exception:  # capability probe only; fall back to conservative numbers
            cap = None
    if cap is not None and cap >= 96 * 1024 * 1024:
        return 64 * 1024 * 1024, 48 * 1024 * 1024        # v5e / v6e
    return 32 * 1024 * 1024, 24 * 1024 * 1024            # v7x or unknown


class PreparedPCA(NamedTuple):
    mean: jax.Array            # (1, d)      resident
    comp_t: jax.Array          # (d, width)  resident
    k: int
    d: int
    width: int
    storage_dtype: Optional[Any]


def prepare_pca(mean, components, *, storage_dtype=None, lane_dense_output=None):
    """One-time layout prep, hoisted out of the per-call transform path.

    * components is transposed to (d, width); width is k padded to a multiple
      of 128 (lane-dense unmasked stores) only when the padding does not blow
      up output HBM write traffic, otherwise the compact full-dim width k is
      kept (masked stores, far fewer output bytes when k is tiny).
    * mean is reshaped to (1, d) and subtracted in-kernel (exact semantics).
    * storage_dtype=jnp.bfloat16 opts into a half-width X / components stream.
    """
    k, d = components.shape
    k_pad = _round_up(k, 128)
    if lane_dense_output is None:
        lane_dense_output = (k % 128 == 0) or (k_pad <= 2 * k)
    width = k_pad if lane_dense_output else k

    comp_dtype = storage_dtype if storage_dtype is not None else components.dtype
    comp_t = components.T.astype(comp_dtype)                    # (d, k)
    if width != k:
        comp_t = jnp.pad(comp_t, ((0, 0), (0, width - k)))      # zero columns

    mean_dtype = storage_dtype if storage_dtype is not None else mean.dtype
    mean_p = jnp.asarray(mean).reshape(1, d).astype(mean_dtype)
    return PreparedPCA(mean=mean_p, comp_t=comp_t, k=k, d=d, width=width,
                       storage_dtype=storage_dtype)


# ------------------------------ transform ------------------------------------

def pca_transform(x, prepared: PreparedPCA, *, tm=512,
                  precision=jax.lax.Precision.DEFAULT):
    """(X - mean_) @ components_.T via a single-pass Pallas TPU kernel."""
    n, d = x.shape
    assert d == prepared.d, (d, prepared.d)
    mean_p, comp_t = prepared.mean, prepared.comp_t
    k, width = prepared.k, prepared.width

    # Opt-in reduced-precision storage (halves the dominant X HBM stream).
    x_in = x
    if prepared.storage_dtype is not None and x.dtype != prepared.storage_dtype:
        x_in = x.astype(prepared.storage_dtype)

    limit_bytes, tile_budget = _vmem_budgets()

    # ---- row tile: big, 8-aligned, within the VMEM budget --------------------
    tm = max(8, min(int(tm), _round_up(n, 8)))
    tm = _round_up(tm, 8)

    x_isz = x_in.dtype.itemsize
    c_isz = comp_t.dtype.itemsize
    m_isz = mean_p.dtype.itemsize
    o_isz = 4  # float32 output
    # comp^T and mean have constant block indices, but the default pipeline
    # still allocates two buffers for them -> count them twice.
    resident = 2 * (d * width * c_isz + d * m_isz)

    def tile_bytes(t):
        return 2 * t * d * x_isz + 2 * t * width * o_isz + resident

    while tm > 8 and tile_bytes(tm) > tile_budget:
        tm = max(8, _round_up(tm // 2, 8))
    # TODO(synk): if d*width is so large that even tm=8 overflows the budget,
    # add a K-axis grid with an f32 accumulator instead of a resident comp^T.

    # v7x has 2 TensorCores: make sure the parallel row grid has >= 2 steps so
    # both cores get work (one extra ~0.35us step on 1-TC v5e/v6e is noise).
    if n >= 16 and pl.cdiv(n, tm) < 2:
        tm = _round_up(pl.cdiv(n, 2), 8)

    grid = (pl.cdiv(n, tm),)   # ragged tail handled by Pallas edge-block
                               # masking; no padded copy of X is materialized.

    out = pl.pallas_call(
        functools.partial(_pca_kernel, precision=precision),
        out_shape=jax.ShapeDtypeStruct((n, width), jnp.float32),
        grid_spec=pltpu.PrefetchScalarGridSpec(
            num_scalar_prefetch=0,
            grid=grid,
            in_specs=[
                pl.BlockSpec((tm, d), lambda i: (i, 0)),       # X rows (streamed)
                pl.BlockSpec((1, d), lambda i: (0, 0)),        # mean_   (resident)
                pl.BlockSpec((d, width), lambda i: (0, 0)),    # comp^T  (resident)
            ],
            out_specs=pl.BlockSpec((tm, width), lambda i: (i, 0)),
        ),
        compiler_params=pltpu.CompilerParams(
            dimension_semantics=("parallel",),
            vmem_limit_bytes=limit_bytes,
        ),
    )(x_in, mean_p, comp_t)

    return out if width == k else out[:, :k]


# ---- plain-JAX "fit" glue (SVD is parameter setup, not the forward hot path) --

def _svd_flip(u, v):
    max_abs_cols = jnp.argmax(jnp.abs(u), axis=0)
    signs = jnp.sign(u[max_abs_cols, jnp.arange(u.shape[1])])
    return u * signs, v * signs[:, None]


def pca_fit(X, n_components):
    n, d = X.shape
    k = min(n_components, d)
    mean = X.mean(axis=0, keepdims=True)                 # (1, d)
    Z = X - mean
    U, S, Vh = jnp.linalg.svd(Z, full_matrices=False)
    U, Vt = _svd_flip(U, Vh)
    return mean, Vt[:k]                                  # mean_, components_


# ------------------------------ demo / test -----------------------------------

if __name__ == "__main__":
    key = jax.random.PRNGKey(0)
    kfit, kx = jax.random.split(key)

    n_components = 8
    n, d = 20, 32          # n not a multiple of the row tile -> ragged edge block

    # deterministic "training" data with a non-zero mean (stresses the exact
    # in-kernel (X - mean) subtraction rather than an offset fold)
    X_fit = jax.random.normal(kfit, (64, d), dtype=jnp.float32) + 5.0
    mean, components = pca_fit(X_fit, n_components)

    # forward input
    X = jax.random.normal(kx, (n, d), dtype=jnp.float32) + 5.0

    prepared = prepare_pca(mean, components)             # hoisted one-time prep

    out_hi = pca_transform(X, prepared, precision=jax.lax.Precision.HIGHEST)
    out_fast = pca_transform(X, prepared)                 # DEFAULT precision path
    out_hi, out_fast = jax.block_until_ready((out_hi, out_fast))

    # reference: PyTorch forward semantics, (X - mean_) @ components_.T
    ref = jnp.matmul(X - mean, components.T, precision=jax.lax.Precision.HIGHEST)

    assert out_hi.shape == (n, n_components)
    assert out_fast.shape == (n, n_components)
    assert jnp.allclose(out_hi, ref, atol=1e-4, rtol=1e-4), float(
        jnp.max(jnp.abs(out_hi - ref)))
    assert jnp.allclose(out_fast, ref, atol=5e-2, rtol=5e-2), float(
        jnp.max(jnp.abs(out_fast - ref)))

    print("KERNEL_OK")
</pallas_src>

<mosaic_0001>
module attributes {stable_mosaic.version = 11 : i64} {
  func.func @_pca_kernel(%arg0: i32, %arg1: memref<16x32xf32, #tpu.memory_space<vmem>>, %arg2: memref<1x32xf32, #tpu.memory_space<vmem>>, %arg3: memref<32x8xf32, #tpu.memory_space<vmem>>, %arg4: memref<16x8xf32, #tpu.memory_space<vmem>>) attributes {dimension_semantics = [#tpu.dimension_semantics<parallel>], iteration_bounds = array<i64: 2>, scalar_prefetch = 0 : i64, scratch_operands = 0 : i64, tpu.core_type = #tpu.core_type<tc>, window_params = [{transform_indices = @transform_0, window_bounds = array<i64: 16, 32>}, {pipeline_mode = #tpu.pipeline_mode<synchronous>, transform_indices = @transform_1, window_bounds = array<i64: 1, 32>}, {pipeline_mode = #tpu.pipeline_mode<synchronous>, transform_indices = @transform_2, window_bounds = array<i64: 32, 8>}, {transform_indices = @transform_3, window_bounds = array<i64: 16, 8>}]} {
    %c0 = arith.constant 0 : index
    %c0_0 = arith.constant 0 : index
    %0 = vector.load %arg1[%c0, %c0_0] : memref<16x32xf32, #tpu.memory_space<vmem>>, vector<16x32xf32>
    %c0_1 = arith.constant 0 : index
    %c0_2 = arith.constant 0 : index
    %1 = vector.load %arg2[%c0_1, %c0_2] : memref<1x32xf32, #tpu.memory_space<vmem>>, vector<1x32xf32>
    %2 = vector.broadcast %1 : vector<1x32xf32> to vector<16x32xf32>
    %3 = arith.subf %0, %2 : vector<16x32xf32>
    %c0_3 = arith.constant 0 : index
    %c0_4 = arith.constant 0 : index
    %4 = vector.load %arg3[%c0_3, %c0_4] : memref<32x8xf32, #tpu.memory_space<vmem>>, vector<32x8xf32>
    %cst = arith.constant dense<0.000000e+00> : vector<16x8xf32>
    %5 = tpu.matmul %3, %4, %cst {dimension_numbers = #tpu.dot_dimension_numbers<[1], [0], [0], [1], [0, 0, 1, 1], [], []>, precision = #tpu.contract_precision<fp32>} : vector<16x32xf32>, vector<32x8xf32>, vector<16x8xf32> -> vector<16x8xf32>
    %c0_5 = arith.constant 0 : index
    %c0_6 = arith.constant 0 : index
    %6 = vector.load %arg4[%c0_5, %c0_6] : memref<16x8xf32, #tpu.memory_space<vmem>>, vector<16x8xf32>
    tpu.vector_store %arg4[%c0_5, %c0_6], %5 {strides = array<i32>} : memref<16x8xf32, #tpu.memory_space<vmem>>, vector<16x8xf32>,
    return
  }
  func.func @transform_0(%arg0: i32) -> (i32, i32) {
    %c0_i32 = arith.constant 0 : i32
    %c0_i32_0 = arith.constant 0 : i32
    return %arg0, %c0_i32 : i32, i32
  }
  func.func @transform_1(%arg0: i32) -> (i32, i32) {
    %c0_i32 = arith.constant 0 : i32
    %c0_i32_0 = arith.constant 0 : i32
    %c0_i32_1 = arith.constant 0 : i32
    return %c0_i32, %c0_i32_0 : i32, i32
  }
  func.func @transform_2(%arg0: i32) -> (i32, i32) {
    %c0_i32 = arith.constant 0 : i32
    %c0_i32_0 = arith.constant 0 : i32
    %c0_i32_1 = arith.constant 0 : i32
    return %c0_i32, %c0_i32_0 : i32, i32
  }
  func.func @transform_3(%arg0: i32) -> (i32, i32) {
    %c0_i32 = arith.constant 0 : i32
    %c0_i32_0 = arith.constant 0 : i32
    return %arg0, %c0_i32 : i32, i32
  }
}

</mosaic_0001>

<llo_original>
// kernel: tpu_custom_call.1
$region0: #{tpu_custom_call.1}
  #allocation0 [shape = 'u32[]', space=smem, size = 0x4, offset = 0x4, fixed_abs, tag = 'smem constant byte address 0x4 - core index']
  #allocation1 [shape = 'u32[72,128]{1,0:T(1,128)}', space=vmem, size = 0x9000, scoped, tag = 'internal scratch']
  %s0 = inlined_call_operand.vmem [shape: f32[20,32], index: 0, kind: input, shape index: {}]
  %s1 = inlined_call_operand.vmem [shape: f32[1,32], index: 1, kind: input, shape index: {}]
  %s2 = inlined_call_operand.vmem [shape: f32[32,8], index: 2, kind: input, shape index: {}]
  %s3 = inlined_call_operand.vmem [shape: f32[20,8], index: 3, kind: output, shape index: {}]
  %s4 = sld [smem:[#allocation0]]
  $region93: #{tpu_custom_call.1} parent=0
    _
  %s6 = ssub.s32 1, %s4
  %s7 = scalar_select 0, %s6, %s4
  $region1: #{tpu_custom_call.1} parent=0
    #allocation2 [shape = 'u8[16384]{0}', space=vmem, size = 0x4000, scoped, tag = 'output window, operand 0']
    loop: start=0, step=1, limit=4
    $region2: #{tpu_custom_call.1} parent=1 // loop_pre_header
      _
    $region3: #{tpu_custom_call.1} parent=1 // loop_header
      %s9 = sphi 0, %s13
      %p10 = scmp.ge.s32.totalorder %s9, 4
      %s19 = sphi 0, %s21
      %s22 = sphi 0, %s19
      %s23 = sphi 0, %s22
      %s39 = sphi 0, %s23
      %s43 = sphi 0, %s43
      %s45 = sphi 0, %s43
      %s46 = sphi 0, %s45
      %s60 = sphi 0, %s46
      %s64 = sphi 0, %s64
      %s66 = sphi 0, %s64
      %s67 = sphi 0, %s66
      %s81 = sphi 0, %s67
      %s87 = sphi 0, %s89
      %s90 = sphi 0, %s87
      %s91 = sphi 0, %s90
      %s107 = sphi 0, %s91
    $region4: #{tpu_custom_call.1} parent=1 // loop_header_branch
      %12 = sbr.rel (%p10) target = $region8
    $region5: #{tpu_custom_call.1} parent=1 // loop_body
      %s14 = ssub.s32 %s9, 1
      %s15 = ssub.s32 %s9, 2
      %s16 = sadd.s32 %s9, 1
      %s17 = ssub.s32 %s9, %s16
      %p18 = scmp.eq.s32.totalorder %s17, 0
      %s20 = sadd.s32 %s19, 1
      %s21 = scalar_select %p18, %s19, %s20
      %p24 = pneg %p18
      %p25 = scmp.eq.s32.totalorder %s9, 1
      %p26 = por %p24, %p25
      %p27 = scmp.ne.s32.totalorder %s19, %s22
      %p28 = scmp.eq.s32.totalorder %s9, 0
      %p29 = por %p27, %p28
      %p30 = scmp.ne.s32.totalorder %s19, %s22
      %p31 = scmp.eq.s32.totalorder %s14, 1
      %p32 = por %p30, %p31
      %p33 = scmp.ne.s32.totalorder %s22, %s23
      %p34 = scmp.eq.s32.totalorder %s14, 0
      %p35 = por %p33, %p34
      %p36 = scmp.ne.s32.totalorder %s22, %s23
      %p37 = scmp.eq.s32.totalorder %s15, 1
      %p38 = por %p36, %p37
      %p40 = scmp.ne.s32.totalorder %s23, %s39
      %p41 = scmp.eq.s32.totalorder %s15, 0
      %p42 = por %p40, %p41
      %s44 = sadd.s32 %s43, 1
      %p47 = scmp.eq.s32.totalorder %s9, 1
      %p48 = scmp.ne.s32.totalorder %s43, %s45
      %p49 = scmp.eq.s32.totalorder %s9, 0
      %p50 = por %p48, %p49
      %p51 = scmp.ne.s32.totalorder %s43, %s45
      %p52 = scmp.eq.s32.totalorder %s14, 1
      %p53 = por %p51, %p52
      %p54 = scmp.ne.s32.totalorder %s45, %s46
      %p55 = scmp.eq.s32.totalorder %s14, 0
      %p56 = por %p54, %p55
      %p57 = scmp.ne.s32.totalorder %s45, %s46
      %p58 = scmp.eq.s32.totalorder %s15, 1
      %p59 = por %p57, %p58
      %p61 = scmp.ne.s32.totalorder %s46, %s60
      %p62 = scmp.eq.s32.totalorder %s15, 0
      %p63 = por %p61, %p62
      %s65 = sadd.s32 %s64, 1
      %p68 = scmp.eq.s32.totalorder %s9, 1
      %p69 = scmp.ne.s32.totalorder %s64, %s66
      %p70 = scmp.eq.s32.totalorder %s9, 0
      %p71 = por %p69, %p70
      %p72 = scmp.ne.s32.totalorder %s64, %s66
      %p73 = scmp.eq.s32.totalorder %s14, 1
      %p74 = por %p72, %p73
      %p75 = scmp.ne.s32.totalorder %s66, %s67
      %p76 = scmp.eq.s32.totalorder %s14, 0
      %p77 = por %p75, %p76
      %p78 = scmp.ne.s32.totalorder %s66, %s67
      %p79 = scmp.eq.s32.totalorder %s15, 1
      %p80 = por %p78, %p79
      %p82 = scmp.ne.s32.totalorder %s67, %s81
      %p83 = scmp.eq.s32.totalorder %s15, 0
      %p84 = por %p82, %p83
      %s85 = ssub.s32 %s9, %s16
      %p86 = scmp.eq.s32.totalorder %s85, 0
      %s88 = sadd.s32 %s87, 1
      %s89 = scalar_select %p86, %s87, %s88
      %p92 = pneg %p86
      %p93 = scmp.eq.s32.totalorder %s9, 1
      %p94 = por %p92, %p93
      %p95 = scmp.ne.s32.totalorder %s87, %s90
      %p96 = scmp.eq.s32.totalorder %s9, 0
      %p97 = por %p95, %p96
      %p98 = scmp.ne.s32.totalorder %s87, %s90
      %p99 = scmp.eq.s32.totalorder %s14, 1
      %p100 = por %p98, %p99
      %p101 = scmp.ne.s32.totalorder %s90, %s91
      %p102 = scmp.eq.s32.totalorder %s14, 0
      %p103 = por %p101, %p102
      %p104 = scmp.ne.s32.totalorder %s90, %s91
      %p105 = scmp.eq.s32.totalorder %s15, 1
      %p106 = por %p104, %p105
      %p108 = scmp.ne.s32.totalorder %s91, %s107
      %p109 = scmp.eq.s32.totalorder %s15, 0
      %p110 = por %p108, %p109
      %p111 = scmp.le.s32.totalorder 1, %s9
      %p112 = scmp.lt.s32.totalorder %s9, 3
      %p113 = pnand %p111, %p112
      %p114 = pneg %p113
      // Predicated region
      $region9: #{tpu_custom_call.1} parent=5 // pred_check
        _
      $region10: #{tpu_custom_call.1} parent=5 // pred_check_branch
        %116 = sbr.rel (%p113) target = $region12
      $region11: #{tpu_custom_call.1} parent=5 // pred_region
        %s117 = ssub.s32 %s9, 1
        // Predicated region
        $region13: #{tpu_custom_call.1} parent=11 // pred_check
          %p118 = pneg %p56
        $region14: #{tpu_custom_call.1} parent=11 // pred_check_branch
          %120 = sbr.rel (%p118) target = $region16
        $region15: #{tpu_custom_call.1} parent=11 // pred_region
          _
        $region16: #{tpu_custom_call.1} parent=11 // pred_fallthru
          _
        // Predicated region
        $region17: #{tpu_custom_call.1} parent=11 // pred_check
          %p121 = pneg %p77
        $region18: #{tpu_custom_call.1} parent=11 // pred_check_branch
          %123 = sbr.rel (%p121) target = $region20
        $region19: #{tpu_custom_call.1} parent=11 // pred_region
          _
        $region20: #{tpu_custom_call.1} parent=11 // pred_fallthru
          _
      $region12: #{tpu_custom_call.1} parent=5 // pred_fallthru
        _
      %p124 = scmp.lt.s32.totalorder %s9, 2
      // Predicated region
      $region21: #{tpu_custom_call.1} parent=5 // pred_check
        %p125 = pneg %p124
      $region22: #{tpu_custom_call.1} parent=5 // pred_check_branch
        %127 = sbr.rel (%p125) target = $region24
      $region23: #{tpu_custom_call.1} parent=5 // pred_region
        // Predicated region
        $region25: #{tpu_custom_call.1} parent=23 // pred_check
          %p128 = pneg %p29
        $region26: #{tpu_custom_call.1} parent=23 // pred_check_branch
          %130 = sbr.rel (%p128) target = $region28
        $region27: #{tpu_custom_call.1} parent=23 // pred_region
          %s131 = smul.u32 2, %s9
          %s132 = ssub.s32 3, %s131
          %p133 = scmp.lt.s32.totalorder %s132, 2
          %s134 = scalar_select %p133, %s132, 2
          %s135 = smul.u32 8, %s134
          %p136 = scmp.lt.s32.totalorder %s131, 2
          %s137 = scalar_select %p136, %s131, 2
          %s138 = smul.addr %s137, 8
          %s139 = scalar_lea.vmem %s0, %s138
          %s140 = smul.u32 2, %s9
          %s141 = ssub.s32 3, %s140
          %p142 = scmp.lt.s32.totalorder %s141, 2
          %s143 = scalar_select %p142, %s141, 2
          %s144 = smul.u32 8, %s143
        $region28: #{tpu_custom_call.1} parent=23 // pred_fallthru
          _
      $region24: #{tpu_custom_call.1} parent=5 // pred_fallthru
        _
      %p145 = scmp.le.s32.totalorder 1, %s9
      %p146 = scmp.lt.s32.totalorder %s9, 3
      %p147 = pnand %p145, %p146
      %p148 = pneg %p147
      // Predicated region
      $region29: #{tpu_custom_call.1} parent=5 // pred_check
        _
      $region30: #{tpu_custom_call.1} parent=5 // pred_check_branch
        %150 = sbr.rel (%p147) target = $region32
      $region31: #{tpu_custom_call.1} parent=5 // pred_region
        %s151 = ssub.s32 %s9, 1
        %s152 = smul.u32 2, %s14
        %s153 = ssub.s32 3, %s152
        %p154 = scmp.lt.s32.totalorder %s153, 2
        %s155 = scalar_select %p154, %s153, 2
        %s156 = smul.u32 8, %s155
        %p157 = scmp.lt.s32.totalorder %s152, 2
        %s158 = scalar_select %p157, %s152, 2
        %s159 = smul.addr %s158, 8
        %s160 = scalar_lea.vmem %s0, %s159
        %p161 = pneg %p35
        %p162 = pneg %p32
        %p163 = pneg %p56
        %p164 = pneg %p53
        %p165 = pneg %p77
        %p166 = pneg %p74
        %p167 = pneg %p103
        %p168 = pneg %p100
        %s169 = sand.u32 %s90, 1
        %s170 = sand.u32 %s90, 1
        %s171 = smul.addr %s170, 16
        %s172 = scalar_lea.vmem [#allocation2], %s171
        %s173 = smul.u32 2, %s14
        %s174 = ssub.s32 3, %s173
        %p175 = scmp.lt.s32.totalorder %s174, 2
        %s176 = scalar_select %p175, %s174, 2
        %s177 = smul.u32 8, %s176
        %p178 = scmp.lt.s32.totalorder %s173, 2
        %s179 = scalar_select %p178, %s173, 2
        %s180 = smul.addr %s179, 8
        %s181 = scalar_lea.vmem %s0, %s180
        %s182 = smul.u32 2, %s14
        %s183 = ssub.s32 3, %s182
        %p184 = scmp.lt.s32.totalorder %s183, 2
        %s185 = scalar_select %p184, %s183, 2
        %s186 = smul.u32 8, %s185
        %s187 = smul.u32 2, %s14
        %s188 = ssub.s32 3, %s187
        %p189 = scmp.lt.s32.totalorder %s188, 2
        %s190 = scalar_select %p189, %s188, 2
        %s191 = smul.u32 8, %s190
        %v192 = vld [vmem:[%s181] sm:$0xff]
        %v193 = vld [vmem:[%s181 + $0x8] sm:$0xff]
        %v194 = vld [vmem:[%s1] sm:$0x1]
        %v196 = vperm.slane %v194, 0
        %v198 = vsub.f32 %v192, %v196
        %v199 = vsub.f32 %v193, %v196
        %v200 = vld [vmem:[%s2] sm:$0xff]
        %v201 = vld [vmem:[%s2 + $0x8] sm:$0xff]
        %v202 = vld [vmem:[%s2 + $0x10] sm:$0xff]
        %v203 = vld [vmem:[%s2 + $0x18] sm:$0xff]
        %vm204 = vcmask 261120
        %v206 = vsel %vm204, %v198, 0
        %v209 = vsel %vm204, %v199, 0
        %211 = vmatpush.msra.mxu0 0.0
        %212 = vmatpush.msra.mxu0 0.0
        %213 = vmatpush.msra.mxu0 0.0
        %214 = vmatpush.msra.mxu0 0.0
        %215 = vmatpush.msra.mxu0 0.0
        %216 = vmatpush.msra.mxu0 0.0
        %217 = vmatpush.msra.mxu0 0.0
        %218 = vmatpush.msra.mxu0 0.0
        %219 = vmatpush.msra.mxu0 0.0
        %220 = vmatpush.msra.mxu0 0.0
        %221 = vmatpush.msra.mxu0 0.0
        %222 = vmatpush.msra.mxu0 0.0
        %v223 = vand.u32 %v203, 4294901760
        %224 = vmatpush.msra.mxu0 %v223
        %v225 = vand.u32 %v202, 4294901760
        %226 = vmatpush.msra.mxu0 %v225
        %v227 = vand.u32 %v201, 4294901760
        %228 = vmatpush.msra.mxu0 %v227
        %v229 = vand.u32 %v200, 4294901760
        %230 = vmatpush.msra.mxu0 %v229
        %v231 = vand.u32 %v206, 4294901760
        %v232 = vsub.f32 %v206, %v231
        %v233 = vand.u32 %v232, 4294901760
        %v234 = vsub.f32 %v232, %v233
        %v235 = vand.u32 %v234, 4294901760
        %236 = vmatmul.f32.gmra.mxu0 %v235
        %v237 = vpop.f32.mrf.mxu0
        %v238 = vadd.f32 0.0, %v237
        %v239 = vand.u32 %v209, 4294901760
        %v240 = vsub.f32 %v209, %v239
        %v241 = vand.u32 %v240, 4294901760
        %v242 = vsub.f32 %v240, %v241
        %v243 = vand.u32 %v242, 4294901760
        %244 = vmatmul.f32.gmra.mxu0 %v243
        %v245 = vpop.f32.mrf.mxu0
        %v246 = vadd.f32 0.0, %v245
        %247 = vdwg.mxu0
        %248 = vmatpush.msra.mxu0 0.0
        %249 = vmatpush.msra.mxu0 0.0
        %250 = vmatpush.msra.mxu0 0.0
        %251 = vmatpush.msra.mxu0 0.0
        %252 = vmatpush.msra.mxu0 0.0
        %253 = vmatpush.msra.mxu0 0.0
        %254 = vmatpush.msra.mxu0 0.0
        %255 = vmatpush.msra.mxu0 0.0
        %256 = vmatpush.msra.mxu0 0.0
        %257 = vmatpush.msra.mxu0 0.0
        %258 = vmatpush.msra.mxu0 0.0
        %259 = vmatpush.msra.mxu0 0.0
        %v260 = vand.u32 %v203, 4294901760
        %v261 = vsub.f32 %v203, %v260
        %v262 = vand.u32 %v261, 4294901760
        %v263 = vsub.f32 %v261, %v262
        %v264 = vand.u32 %v263, 4294901760
        %265 = vmatpush.msra.mxu0 %v264
        %v266 = vand.u32 %v202, 4294901760
        %v267 = vsub.f32 %v202, %v266
        %v268 = vand.u32 %v267, 4294901760
        %v269 = vsub.f32 %v267, %v268
        %v270 = vand.u32 %v269, 4294901760
        %271 = vmatpush.msra.mxu0 %v270
        %v272 = vand.u32 %v201, 4294901760
        %v273 = vsub.f32 %v201, %v272
        %v274 = vand.u32 %v273, 4294901760
        %v275 = vsub.f32 %v273, %v274
        %v276 = vand.u32 %v275, 4294901760
        %277 = vmatpush.msra.mxu0 %v276
        %v278 = vand.u32 %v200, 4294901760
        %v279 = vsub.f32 %v200, %v278
        %v280 = vand.u32 %v279, 4294901760
        %v281 = vsub.f32 %v279, %v280
        %v282 = vand.u32 %v281, 4294901760
        %283 = vmatpush.msra.mxu0 %v282
        %v284 = vand.u32 %v206, 4294901760
        %285 = vmatmul.f32.gmra.mxu0 %v284
        %v286 = vpop.f32.mrf.mxu0
        %v287 = vadd.f32 %v238, %v286
        %v288 = vand.u32 %v209, 4294901760
        %289 = vmatmul.f32.gmra.mxu0 %v288
        %v290 = vpop.f32.mrf.mxu0
        %v291 = vadd.f32 %v246, %v290
        %292 = vdwg.mxu0
        %293 = vmatpush.msra.mxu0 0.0
        %294 = vmatpush.msra.mxu0 0.0
        %295 = vmatpush.msra.mxu0 0.0
        %296 = vmatpush.msra.mxu0 0.0
        %297 = vmatpush.msra.mxu0 0.0
        %298 = vmatpush.msra.mxu0 0.0
        %299 = vmatpush.msra.mxu0 0.0
        %300 = vmatpush.msra.mxu0 0.0
        %301 = vmatpush.msra.mxu0 0.0
        %302 = vmatpush.msra.mxu0 0.0
        %303 = vmatpush.msra.mxu0 0.0
        %304 = vmatpush.msra.mxu0 0.0
        %v305 = vand.u32 %v203, 4294901760
        %v306 = vsub.f32 %v203, %v305
        %307 = vmatpush.msra.mxu0 %v306
        %v308 = vand.u32 %v202, 4294901760
        %v309 = vsub.f32 %v202, %v308
        %310 = vmatpush.msra.mxu0 %v309
        %v311 = vand.u32 %v201, 4294901760
        %v312 = vsub.f32 %v201, %v311
        %313 = vmatpush.msra.mxu0 %v312
        %v314 = vand.u32 %v200, 4294901760
        %v315 = vsub.f32 %v200, %v314
        %316 = vmatpush.msra.mxu0 %v315
        %v317 = vand.u32 %v206, 4294901760
        %v318 = vsub.f32 %v206, %v317
        %319 = vmatmul.f32.gmra.mxu0 %v318
        %v320 = vpop.f32.mrf.mxu0
        %v321 = vadd.f32 %v287, %v320
        %v322 = vand.u32 %v209, 4294901760
        %v323 = vsub.f32 %v209, %v322
        %324 = vmatmul.f32.gmra.mxu0 %v323
        %v325 = vpop.f32.mrf.mxu0
        %v326 = vadd.f32 %v291, %v325
        %327 = vdwg.mxu0
        %328 = vmatpush.msra.mxu0 0.0
        %329 = vmatpush.msra.mxu0 0.0
        %330 = vmatpush.msra.mxu0 0.0
        %331 = vmatpush.msra.mxu0 0.0
        %332 = vmatpush.msra.mxu0 0.0
        %333 = vmatpush.msra.mxu0 0.0
        %334 = vmatpush.msra.mxu0 0.0
        %335 = vmatpush.msra.mxu0 0.0
        %336 = vmatpush.msra.mxu0 0.0
        %337 = vmatpush.msra.mxu0 0.0
        %338 = vmatpush.msra.mxu0 0.0
        %339 = vmatpush.msra.mxu0 0.0
        %v340 = vand.u32 %v203, 4294901760
        %341 = vmatpush.msra.mxu0 %v340
        %v342 = vand.u32 %v202, 4294901760
        %343 = vmatpush.msra.mxu0 %v342
        %v344 = vand.u32 %v201, 4294901760
        %345 = vmatpush.msra.mxu0 %v344
        %v346 = vand.u32 %v200, 4294901760
        %347 = vmatpush.msra.mxu0 %v346
        %v348 = vand.u32 %v206, 4294901760
        %v349 = vsub.f32 %v206, %v348
        %v350 = vand.u32 %v349, 4294901760
        %351 = vmatmul.f32.gmra.mxu0 %v350
        %v352 = vpop.f32.mrf.mxu0
        %v353 = vadd.f32 %v321, %v352
        %v354 = vand.u32 %v209, 4294901760
        %v355 = vsub.f32 %v209, %v354
        %v356 = vand.u32 %v355, 4294901760
        %357 = vmatmul.f32.gmra.mxu0 %v356
        %v358 = vpop.f32.mrf.mxu0
        %v359 = vadd.f32 %v326, %v358
        %360 = vdwg.mxu0
        %361 = vmatpush.msra.mxu0 0.0
        %362 = vmatpush.msra.mxu0 0.0
        %363 = vmatpush.msra.mxu0 0.0
        %364 = vmatpush.msra.mxu0 0.0
        %365 = vmatpush.msra.mxu0 0.0
        %366 = vmatpush.msra.mxu0 0.0
        %367 = vmatpush.msra.mxu0 0.0
        %368 = vmatpush.msra.mxu0 0.0
        %369 = vmatpush.msra.mxu0 0.0
        %370 = vmatpush.msra.mxu0 0.0
        %371 = vmatpush.msra.mxu0 0.0
        %372 = vmatpush.msra.mxu0 0.0
        %v373 = vand.u32 %v203, 4294901760
        %v374 = vsub.f32 %v203, %v373
        %v375 = vand.u32 %v374, 4294901760
        %376 = vmatpush.msra.mxu0 %v375
        %v377 = vand.u32 %v202, 4294901760
        %v378 = vsub.f32 %v202, %v377
        %v379 = vand.u32 %v378, 4294901760
        %380 = vmatpush.msra.mxu0 %v379
        %v381 = vand.u32 %v201, 4294901760
        %v382 = vsub.f32 %v201, %v381
        %v383 = vand.u32 %v382, 4294901760
        %384 = vmatpush.msra.mxu0 %v383
        %v385 = vand.u32 %v200, 4294901760
        %v386 = vsub.f32 %v200, %v385
        %v387 = vand.u32 %v386, 4294901760
        %388 = vmatpush.msra.mxu0 %v387
        %v389 = vand.u32 %v206, 4294901760
        %390 = vmatmul.f32.gmra.mxu0 %v389
        %v391 = vpop.f32.mrf.mxu0
        %v392 = vadd.f32 %v353, %v391
        %v393 = vand.u32 %v209, 4294901760
        %394 = vmatmul.f32.gmra.mxu0 %v393
        %v395 = vpop.f32.mrf.mxu0
        %v396 = vadd.f32 %v359, %v395
        %397 = vdwg.mxu0
        %398 = vmatpush.msra.mxu0 0.0
        %399 = vmatpush.msra.mxu0 0.0
        %400 = vmatpush.msra.mxu0 0.0
        %401 = vmatpush.msra.mxu0 0.0
        %402 = vmatpush.msra.mxu0 0.0
        %403 = vmatpush.msra.mxu0 0.0
        %404 = vmatpush.msra.mxu0 0.0
        %405 = vmatpush.msra.mxu0 0.0
        %406 = vmatpush.msra.mxu0 0.0
        %407 = vmatpush.msra.mxu0 0.0
        %408 = vmatpush.msra.mxu0 0.0
        %409 = vmatpush.msra.mxu0 0.0
        %v410 = vand.u32 %v203, 4294901760
        %411 = vmatpush.msra.mxu0 %v410
        %v412 = vand.u32 %v202, 4294901760
        %413 = vmatpush.msra.mxu0 %v412
        %v414 = vand.u32 %v201, 4294901760
        %415 = vmatpush.msra.mxu0 %v414
        %v416 = vand.u32 %v200, 4294901760
        %417 = vmatpush.msra.mxu0 %v416
        %v418 = vand.u32 %v206, 4294901760
        %419 = vmatmul.f32.gmra.mxu0 %v418
        %v420 = vpop.f32.mrf.mxu0
        %v421 = vadd.f32 %v392, %v420
        %v422 = vand.u32 %v209, 4294901760
        %423 = vmatmul.f32.gmra.mxu0 %v422
        %v424 = vpop.f32.mrf.mxu0
        %v425 = vadd.f32 %v396, %v424
        %426 = vdwg.mxu0
        %vm427 = vcmask 64512
        %428 = vst.msk [vmem:[%s172] sm:$0xff] %vm427, %v421
        %429 = vst.msk [vmem:[%s172 + $0x8] sm:$0xff] %vm427, %v425
        %s430 = sand.u32 %s90, 1
        %s431 = sand.u32 %s90, 1
        %s432 = smul.addr %s431, 16
        %s433 = scalar_lea.vmem [#allocation2], %s432
        // Predicated region
        $region33: #{tpu_custom_call.1} parent=31 // pred_check
          %p434 = pneg %p100
        $region34: #{tpu_custom_call.1} parent=31 // pred_check_branch
          %436 = sbr.rel (%p434) target = $region36
        $region35: #{tpu_custom_call.1} parent=31 // pred_region
          %s437 = smul.u32 2, %s14
          %s438 = ssub.s32 3, %s437
          %p439 = scmp.lt.s32.totalorder %s438, 2
          %s440 = scalar_select %p439, %s438, 2
          %s441 = smul.u32 8, %s440
          %p442 = scmp.ne.s32.totalorder 0, %s441
          %s443 = smul.addr %s437, 8
          %s444 = scalar_lea.vmem %s3, %s443
          // Predicated region
          $region37: #{tpu_custom_call.1} parent=35 // pred_check
            %p445 = pneg %p442
          $region38: #{tpu_custom_call.1} parent=35 // pred_check_branch
            %447 = sbr.rel (%p445) target = $region40
          $region39: #{tpu_custom_call.1} parent=35 // pred_region
            // Predicated region
            $region41: #{tpu_custom_call.1} parent=39 // pred_check
              _
            $region42: #{tpu_custom_call.1} parent=39 // pred_check_branch
              %449 = sbr.rel (0) target = $region44
            $region43: #{tpu_custom_call.1} parent=39 // pred_region
              // Predicated region
              $region63: #{tpu_custom_call.1} parent=43 // pred_check
                _
              $region64: #{tpu_custom_call.1} parent=43 // pred_check_branch
                %501 = sbr.rel (0) target = $region66
              $region65: #{tpu_custom_call.1} parent=43 // pred_region
                %s502 = sshrl.u32 %s440, 1
                // While loop
                $region67: #{tpu_custom_call.1} parent=65 // loop_pre_header
                  _
                $region68: #{tpu_custom_call.1} parent=65 // loop_header
                  %s504 = sphi 0, %s506
                  %p505 = scmp.ge.s32.totalorder %s504, %s502
                  %s509 = sphi 0, %s518
                  %s510 = sphi %s433, %s521
                  %s511 = sphi %s444, %s522
                $region69: #{tpu_custom_call.1} parent=65 // loop_header_branch
                  %508 = sbr.rel (%p505) target = $region73
                $region70: #{tpu_custom_call.1} parent=65 // loop_body
                  %v512 = vld [vmem:[%s510] sm:$0xff]
                  %513 = vst [vmem:[%s511] sm:$0xff] %v512
                  %v514 = vld [vmem:[%s510 + $0x8] sm:$0xff]
                  %515 = vst [vmem:[%s511 + $0x8] sm:$0xff] %v514
                  %s516 = sadd.s32 1, %s509
                  %p517 = scmp.ge.s32.totalorder %s516, %s502
                  %s518 = scalar_select %p517, 0, %s516
                  %s519 = smul.u32 %s518, 16
                  %s520 = smul.u32 %s518, 16
                  %s521 = scalar_lea.vmem %s433, %s519 [#allocation2]
                  %s522 = scalar_lea.vmem %s444, %s520
                $region71: #{tpu_custom_call.1} parent=65 // loop_footer
                  %s506 = sadd.s32 %s504, 1
                $region72: #{tpu_custom_call.1} parent=65 // loop_footer_branch
                  %503 = sbr.rel target = $region68
                $region73: #{tpu_custom_call.1} parent=65 // loop_exit
                  _
                %s523 = sshrl.u32 %s440, 1
                %s524 = sand.u32 %s440, 1
                %s525 = smul.u32 %s523, 2
                %s526 = smul.u32 8, %s525
                %s527 = scalar_lea.vmem %s433, %s526 [#allocation2]
                %s528 = smul.u32 8, %s525
                %s529 = scalar_lea.vmem %s444, %s528
                // While loop
                $region74: #{tpu_custom_call.1} parent=65 // loop_pre_header
                  _
                $region75: #{tpu_custom_call.1} parent=65 // loop_header
                  %s531 = sphi 0, %s533
                  %p532 = scmp.ge.s32.totalorder %s531, %s524
                  %s536 = sphi 0, %s543
                  %s537 = sphi %s527, %s546
                  %s538 = sphi %s529, %s547
                $region76: #{tpu_custom_call.1} parent=65 // loop_header_branch
                  %535 = sbr.rel (%p532) target = $region80
                $region77: #{tpu_custom_call.1} parent=65 // loop_body
                  %v539 = vld [vmem:[%s537] sm:$0xff]
                  %540 = vst [vmem:[%s538] sm:$0xff] %v539
                  %s541 = sadd.s32 1, %s536
                  %p542 = scmp.ge.s32.totalorder %s541, %s524
                  %s543 = scalar_select %p542, 0, %s541
                  %s544 = smul.u32 %s543, 8
                  %s545 = smul.u32 %s543, 8
                  %s546 = scalar_lea.vmem %s527, %s544 [#allocation2]
                  %s547 = scalar_lea.vmem %s529, %s545
                $region78: #{tpu_custom_call.1} parent=65 // loop_footer
                  %s533 = sadd.s32 %s531, 1
                $region79: #{tpu_custom_call.1} parent=65 // loop_footer_branch
                  %530 = sbr.rel target = $region75
                $region80: #{tpu_custom_call.1} parent=65 // loop_exit
                  _
              $region66: #{tpu_custom_call.1} parent=43 // pred_fallthru
                _
              // Predicated region
              $region81: #{tpu_custom_call.1} parent=43 // pred_check
                _
              $region82: #{tpu_custom_call.1} parent=43 // pred_check_branch
                %549 = sbr.rel target = $region84
              $region83: #{tpu_custom_call.1} parent=43 // pred_region
                _
              $region84: #{tpu_custom_call.1} parent=43 // pred_fallthru
                _
            $region44: #{tpu_custom_call.1} parent=39 // pred_fallthru
              _
            // Predicated region
            $region45: #{tpu_custom_call.1} parent=39 // pred_check
              _
            $region46: #{tpu_custom_call.1} parent=39 // pred_check_branch
              %451 = sbr.rel target = $region48
            $region47: #{tpu_custom_call.1} parent=39 // pred_region
              %s453 = ssub.s32 256, 1
              %s454 = sshrl.u32 %s440, 1
              // While loop
              $region49: #{tpu_custom_call.1} parent=47 // loop_pre_header
                _
              $region50: #{tpu_custom_call.1} parent=47 // loop_header
                %s456 = sphi 0, %s458
                %p457 = scmp.ge.s32.totalorder %s456, %s454
                %s461 = sphi 0, %s470
                %s462 = sphi %s433, %s473
                %s463 = sphi %s444, %s474
              $region51: #{tpu_custom_call.1} parent=47 // loop_header_branch
                %460 = sbr.rel (%p457) target = $region55
              $region52: #{tpu_custom_call.1} parent=47 // loop_body
                %v464 = vld [vmem:[%s462] sm:%s453]
                %465 = vst [vmem:[%s463] sm:%s453] %v464
                %v466 = vld [vmem:[%s462 + $0x8] sm:%s453]
                %467 = vst [vmem:[%s463 + $0x8] sm:%s453] %v466
                %s468 = sadd.s32 1, %s461
                %p469 = scmp.ge.s32.totalorder %s468, %s454
                %s470 = scalar_select %p469, 0, %s468
                %s471 = smul.u32 %s470, 16
                %s472 = smul.u32 %s470, 16
                %s473 = scalar_lea.vmem %s433, %s471 [#allocation2]
                %s474 = scalar_lea.vmem %s444, %s472
              $region53: #{tpu_custom_call.1} parent=47 // loop_footer
                %s458 = sadd.s32 %s456, 1
              $region54: #{tpu_custom_call.1} parent=47 // loop_footer_branch
                %455 = sbr.rel target = $region50
              $region55: #{tpu_custom_call.1} parent=47 // loop_exit
                _
              %s475 = sshrl.u32 %s440, 1
              %s476 = sand.u32 %s440, 1
              %s477 = smul.u32 %s475, 2
              %s478 = smul.u32 8, %s477
              %s479 = scalar_lea.vmem %s433, %s478 [#allocation2]
              %s480 = smul.u32 8, %s477
              %s481 = scalar_lea.vmem %s444, %s480
              // While loop
              $region56: #{tpu_custom_call.1} parent=47 // loop_pre_header
                _
              $region57: #{tpu_custom_call.1} parent=47 // loop_header
                %s483 = sphi 0, %s485
                %p484 = scmp.ge.s32.totalorder %s483, %s476
                %s488 = sphi 0, %s495
                %s489 = sphi %s479, %s498
                %s490 = sphi %s481, %s499
              $region58: #{tpu_custom_call.1} parent=47 // loop_header_branch
                %487 = sbr.rel (%p484) target = $region62
              $region59: #{tpu_custom_call.1} parent=47 // loop_body
                %v491 = vld [vmem:[%s489] sm:%s453]
                %492 = vst [vmem:[%s490] sm:%s453] %v491
                %s493 = sadd.s32 1, %s488
                %p494 = scmp.ge.s32.totalorder %s493, %s476
                %s495 = scalar_select %p494, 0, %s493
                %s496 = smul.u32 %s495, 8
                %s497 = smul.u32 %s495, 8
                %s498 = scalar_lea.vmem %s479, %s496 [#allocation2]
                %s499 = scalar_lea.vmem %s481, %s497
              $region60: #{tpu_custom_call.1} parent=47 // loop_footer
                %s485 = sadd.s32 %s483, 1
              $region61: #{tpu_custom_call.1} parent=47 // loop_footer_branch
                %482 = sbr.rel target = $region57
              $region62: #{tpu_custom_call.1} parent=47 // loop_exit
                _
            $region48: #{tpu_custom_call.1} parent=39 // pred_fallthru
              _
          $region40: #{tpu_custom_call.1} parent=35 // pred_fallthru
            _
          %550 = vnop
        $region36: #{tpu_custom_call.1} parent=31 // pred_fallthru
          _
      $region32: #{tpu_custom_call.1} parent=5 // pred_fallthru
        _
      %p551 = scmp.le.s32.totalorder 2, %s9
      // Predicated region
      $region85: #{tpu_custom_call.1} parent=5 // pred_check
        %p552 = pneg %p551
      $region86: #{tpu_custom_call.1} parent=5 // pred_check_branch
        %554 = sbr.rel (%p552) target = $region88
      $region87: #{tpu_custom_call.1} parent=5 // pred_region
        %s555 = ssub.s32 %s9, 2
        // Predicated region
        $region89: #{tpu_custom_call.1} parent=87 // pred_check
          %p556 = pneg %p106
        $region90: #{tpu_custom_call.1} parent=87 // pred_check_branch
          %558 = sbr.rel (%p556) target = $region92
        $region91: #{tpu_custom_call.1} parent=87 // pred_region
          %s559 = sand.u32 %s91, 1
          %s560 = sand.u32 %s91, 1
          %s561 = smul.addr %s560, 16
          %s562 = scalar_lea.vmem [#allocation2], %s561
        $region92: #{tpu_custom_call.1} parent=87 // pred_fallthru
          _
      $region88: #{tpu_custom_call.1} parent=5 // pred_fallthru
        _
    $region6: #{tpu_custom_call.1} parent=1 // loop_footer
      %s13 = sadd.s32 1, %s9
    $region7: #{tpu_custom_call.1} parent=1 // loop_footer_branch
      %8 = sbr.rel target = $region3
    $region8: #{tpu_custom_call.1} parent=1 // loop_exit
      _

</llo_original>
